<compile_context>
chip_gen: v6e
topology: v6e:2x2x1
jax: 0.10.0
libtpu: 0.0.40
codegen_flags: <defaults>
</compile_context>

<pallas_src>
import math

import jax
import jax.numpy as jnp
from jax.experimental import pallas as pl
from jax.experimental.pallas import tpu as pltpu

_BIG = 1.0e12            # matches the 1e12 masking constant in the PyTorch module
_CLASS_CHUNK = 1024      # lanes per class chunk (multiple of 128)
_ROW_TILE_CAP = 1024
_MIN_ROW_TILE = 256      # don't shrink below this (v5e/v6e achieved-HBM-BW guidance)
_INPUT_VMEM_BUDGET = 8 * 1024 * 1024   # double-buffered input tiles


def _round_up(x, m):
    return (x + m - 1) // m * m


def _pick_row_tile(b, ck, bytes_per_elem_both_inputs):
    """Largest row tile whose double-buffered input blocks fit the VMEM budget."""
    per_row = 2 * ck * bytes_per_elem_both_inputs        # x2: double buffering
    t = max(8, min(_ROW_TILE_CAP, _INPUT_VMEM_BUDGET // per_row))
    t = (t // 8) * 8
    # Keep >=4 (or >=2) row blocks when the batch allows, so the "parallel"
    # row axis feeds both v7x TensorCores and the pipeline stays deep — but
    # never shrink below _MIN_ROW_TILE rows.
    if b >= 4 * _MIN_ROW_TILE:
        t = min(t, max(_MIN_ROW_TILE, _round_up(pl.cdiv(b, 4), 8)))
    elif b >= 2 * _MIN_ROW_TILE:
        t = min(t, max(_MIN_ROW_TILE, _round_up(pl.cdiv(b, 2), 8)))
    if t >= b:
        t = b   # single block covering all rows; full-extent blocks are always legal
    return t


def _make_kernel(c, ck, num_ck):
    # A lane-validity mask is needed when the class chunking is ragged or when
    # the (single) chunk is not a multiple of 128 lanes: in both cases the
    # physical tile carries garbage lanes that must not feed the logsumexps.
    # The where() below scrubs them at vreg level (iota fills whole vregs).
    need_lane_mask = (c % ck != 0) or (ck % 128 != 0)

    def kernel(yp_ref, yt_ref, loss_ref, mn_ref, mp_ref, sn_ref, sp_ref):
        j = pl.program_id(1)   # class-chunk index (trailing "arbitrary" axis)

        @pl.when(j == 0)
        def _init():
            # Running state of the two online logsumexps.  The appended-zero
            # logit is folded into the init: m = 0, s = exp(0 - 0) = 1.
            mn_ref[...] = jnp.zeros_like(mn_ref)
            mp_ref[...] = jnp.zeros_like(mp_ref)
            sn_ref[...] = jnp.ones_like(sn_ref)
            sp_ref[...] = jnp.ones_like(sp_ref)

        yp = yp_ref[...].astype(jnp.float32)
        is_pos = yt_ref[...] != 0            # native-dtype compare (0/1 mask)
        is_neg = jnp.logical_not(is_pos)
        if need_lane_mask:
            lane = jax.lax.broadcasted_iota(jnp.int32, yp.shape, 1)
            valid = (j * ck + lane) < c
            is_pos = jnp.logical_and(is_pos, valid)
            is_neg = jnp.logical_and(is_neg, valid)

        neg_big = jnp.float32(-_BIG)
        s_neg = jnp.where(is_neg, yp, neg_big)    # non-target logits
        s_pos = jnp.where(is_pos, -yp, neg_big)   # negated target logits

        # Online (running-max) logsumexp update.  Per-branch maxima are kept
        # on purpose: the running max is always >= 0, so s stays >= 1 and the
        # final log never produces -inf, for any logit magnitude.
        new_mn = jnp.maximum(mn_ref[...], jnp.max(s_neg, axis=-1, keepdims=True))
        new_mp = jnp.maximum(mp_ref[...], jnp.max(s_pos, axis=-1, keepdims=True))
        sn_ref[...] = (sn_ref[...] * jnp.exp(mn_ref[...] - new_mn)
                       + jnp.sum(jnp.exp(s_neg - new_mn), axis=-1, keepdims=True))
        sp_ref[...] = (sp_ref[...] * jnp.exp(mp_ref[...] - new_mp)
                       + jnp.sum(jnp.exp(s_pos - new_mp), axis=-1, keepdims=True))
        mn_ref[...] = new_mn
        mp_ref[...] = new_mp

        @pl.when(j == num_ck - 1)
        def _finalize():
            loss_ref[...] = ((mn_ref[...] + jnp.log(sn_ref[...]))
                             + (mp_ref[...] + jnp.log(sp_ref[...])))

    return kernel


def multilabel_categorical_crossentropy(y_pred, y_true):
    """Pallas implementation of Multilabel_Categorical_CrossEntropy.forward."""
    assert y_pred.shape == y_true.shape
    c = y_pred.shape[-1]
    b = max(1, math.prod(y_pred.shape[:-1]))

    yp = y_pred.reshape(b, c)
    yt = y_true.reshape(b, c)
    if yt.dtype == jnp.bool_:
        yt = yt.astype(jnp.int8)   # same byte width; avoids i1 memrefs
    # NOTE: float labels are read directly — a separate f32->int8 quantize
    # pass would cost more HBM traffic than it saves for this mem-bound op.

    ck = c if c <= _CLASS_CHUNK else _CLASS_CHUNK
    num_ck = pl.cdiv(c, ck)
    bytes_per_elem = jnp.dtype(yp.dtype).itemsize + jnp.dtype(yt.dtype).itemsize
    row_tile = _pick_row_tile(b, ck, bytes_per_elem)
    num_rt = pl.cdiv(b, row_tile)

    per_row_loss = pl.pallas_call(
        _make_kernel(c, ck, num_ck),
        out_shape=jax.ShapeDtypeStruct((b, 1), jnp.float32),
        grid_spec=pltpu.PrefetchScalarGridSpec(
            num_scalar_prefetch=0,
            grid=(num_rt, num_ck),
            in_specs=[
                pl.BlockSpec((row_tile, ck), lambda i, j: (i, j)),
                pl.BlockSpec((row_tile, ck), lambda i, j: (i, j)),
            ],
            out_specs=pl.BlockSpec((row_tile, 1), lambda i, j: (i, 0)),
            scratch_shapes=[
                pltpu.VMEM((row_tile, 1), jnp.float32),   # running max (neg)
                pltpu.VMEM((row_tile, 1), jnp.float32),   # running max (pos)
                pltpu.VMEM((row_tile, 1), jnp.float32),   # running sum (neg)
                pltpu.VMEM((row_tile, 1), jnp.float32),   # running sum (pos)
            ],
        ),
        compiler_params=pltpu.CompilerParams(
            dimension_semantics=("parallel", "arbitrary"),
            vmem_limit_bytes=32 * 1024 * 1024,
        ),
    )(yp, yt)

    # Rows beyond b are never written back; divide by the true row count.
    return jnp.sum(per_row_loss) / jnp.float32(b)


def _reference(y_pred, y_true):
    # Pure-JAX mirror of the PyTorch forward, for sanity checking.
    y_pred = (1 - 2 * y_true) * y_pred
    y_pred_neg = y_pred - y_true * _BIG
    y_pred_pos = y_pred - (1 - y_true) * _BIG
    zeros = jnp.zeros_like(y_pred[..., :1])
    y_pred_neg = jnp.concatenate([y_pred_neg, zeros], axis=-1)
    y_pred_pos = jnp.concatenate([y_pred_pos, zeros], axis=-1)
    neg_loss = jax.nn.logsumexp(y_pred_neg, axis=-1)
    pos_loss = jax.nn.logsumexp(y_pred_pos, axis=-1)
    return jnp.mean(neg_loss + pos_loss)


if __name__ == "__main__":
    key = jax.random.PRNGKey(0)
    k1, k2 = jax.random.split(key)

    batch, seq, num_classes = 2, 8, 32
    y_pred = jax.random.normal(k1, (batch, seq, num_classes), dtype=jnp.float32) * 3.0
    # Hard 0/1 labels in float32 (the dtype the PyTorch module would see);
    # the kernel reads them directly with a native-dtype compare.
    y_true = (jax.random.uniform(k2, (batch, seq, num_classes)) < 0.3).astype(jnp.float32)

    loss_fn = jax.jit(multilabel_categorical_crossentropy)
    loss = jax.block_until_ready(loss_fn(y_pred, y_true))

    ref = _reference(y_pred, y_true)
    assert jnp.allclose(loss, ref, rtol=1e-5, atol=1e-5), (loss, ref)

    print("KERNEL_OK")
</pallas_src>

<mosaic_0001>
module attributes {stable_mosaic.version = 11 : i64} {
  func.func @kernel(%arg0: i32, %arg1: i32, %arg2: memref<16x32xf32, #tpu.memory_space<vmem>>, %arg3: memref<16x32xf32, #tpu.memory_space<vmem>>, %arg4: memref<16x1xf32, #tpu.memory_space<vmem>>, %arg5: memref<16x1xf32, #tpu.memory_space<vmem>>, %arg6: memref<16x1xf32, #tpu.memory_space<vmem>>, %arg7: memref<16x1xf32, #tpu.memory_space<vmem>>, %arg8: memref<16x1xf32, #tpu.memory_space<vmem>>) attributes {dimension_semantics = [#tpu.dimension_semantics<parallel>, #tpu.dimension_semantics<arbitrary>], iteration_bounds = array<i64: 1, 1>, scalar_prefetch = 0 : i64, scratch_operands = 4 : i64, tpu.core_type = #tpu.core_type<tc>, window_params = [{transform_indices = @transform_0, window_bounds = array<i64: 16, 32>}, {transform_indices = @transform_1, window_bounds = array<i64: 16, 32>}, {transform_indices = @transform_2, window_bounds = array<i64: 16, 1>}]} {
    %c0_i32 = arith.constant 0 : i32
    %0 = arith.cmpi eq, %arg1, %c0_i32 : i32
    %1 = arith.extui %0 : i1 to i32
    %c0_i32_0 = arith.constant 0 : i32
    %2 = arith.cmpi ne, %1, %c0_i32_0 : i32
    scf.if %2 {
      %cst_35 = arith.constant 0.000000e+00 : f32
      %59 = vector.broadcast %cst_35 : f32 to vector<16x1xf32>
      %c0_36 = arith.constant 0 : index
      %c0_37 = arith.constant 0 : index
      %60 = vector.load %arg5[%c0_36, %c0_37] : memref<16x1xf32, #tpu.memory_space<vmem>>, vector<16x1xf32>
      tpu.vector_store %arg5[%c0_36, %c0_37], %59 {strides = array<i32>} : memref<16x1xf32, #tpu.memory_space<vmem>>, vector<16x1xf32>,
      %cst_38 = arith.constant 0.000000e+00 : f32
      %61 = vector.broadcast %cst_38 : f32 to vector<16x1xf32>
      %c0_39 = arith.constant 0 : index
      %c0_40 = arith.constant 0 : index
      %62 = vector.load %arg6[%c0_39, %c0_40] : memref<16x1xf32, #tpu.memory_space<vmem>>, vector<16x1xf32>
      tpu.vector_store %arg6[%c0_39, %c0_40], %61 {strides = array<i32>} : memref<16x1xf32, #tpu.memory_space<vmem>>, vector<16x1xf32>,
      %cst_41 = arith.constant 1.000000e+00 : f32
      %63 = vector.broadcast %cst_41 : f32 to vector<16x1xf32>
      %c0_42 = arith.constant 0 : index
      %c0_43 = arith.constant 0 : index
      %64 = vector.load %arg7[%c0_42, %c0_43] : memref<16x1xf32, #tpu.memory_space<vmem>>, vector<16x1xf32>
      tpu.vector_store %arg7[%c0_42, %c0_43], %63 {strides = array<i32>} : memref<16x1xf32, #tpu.memory_space<vmem>>, vector<16x1xf32>,
      %cst_44 = arith.constant 1.000000e+00 : f32
      %65 = vector.broadcast %cst_44 : f32 to vector<16x1xf32>
      %c0_45 = arith.constant 0 : index
      %c0_46 = arith.constant 0 : index
      %66 = vector.load %arg8[%c0_45, %c0_46] : memref<16x1xf32, #tpu.memory_space<vmem>>, vector<16x1xf32>
      tpu.vector_store %arg8[%c0_45, %c0_46], %65 {strides = array<i32>} : memref<16x1xf32, #tpu.memory_space<vmem>>, vector<16x1xf32>,
    } else {
    }
    %c0 = arith.constant 0 : index
    %c0_1 = arith.constant 0 : index
    %3 = vector.load %arg2[%c0, %c0_1] : memref<16x32xf32, #tpu.memory_space<vmem>>, vector<16x32xf32>
    %c0_2 = arith.constant 0 : index
    %c0_3 = arith.constant 0 : index
    %4 = vector.load %arg3[%c0_2, %c0_3] : memref<16x32xf32, #tpu.memory_space<vmem>>, vector<16x32xf32>
    %cst = arith.constant 0.000000e+00 : f32
    %5 = vector.broadcast %cst : f32 to vector<16x32xf32>
    %6 = arith.cmpf one, %4, %5 : vector<16x32xf32>
    %cst_4 = arith.constant dense<true> : vector<16x32xi1>
    %7 = arith.xori %6, %cst_4 : vector<16x32xi1>
    %8 = tpu.iota {dimensions = array<i32: 1>} : vector<16x32xi32>
    %c32_i32 = arith.constant 32 : i32
    %9 = arith.muli %arg1, %c32_i32 : i32
    %10 = vector.broadcast %9 : i32 to vector<16x32xi32>
    %11 = arith.addi %10, %8 : vector<16x32xi32>
    %c32_i32_5 = arith.constant 32 : i32
    %12 = vector.broadcast %c32_i32_5 : i32 to vector<16x32xi32>
    %13 = arith.cmpi slt, %11, %12 : vector<16x32xi32>
    %14 = arith.andi %6, %13 : vector<16x32xi1>
    %15 = arith.andi %7, %13 : vector<16x32xi1>
    %cst_6 = arith.constant -9.99999995E+11 : f32
    %16 = vector.broadcast %cst_6 : f32 to vector<16x32xf32>
    %17 = arith.select %15, %3, %16 : vector<16x32xi1>, vector<16x32xf32>
    %cst_7 = arith.constant 0.000000e+00 : f32
    %18 = vector.broadcast %cst_7 : f32 to vector<16x32xf32>
    %19 = arith.subf %18, %3 : vector<16x32xf32>
    %cst_8 = arith.constant -9.99999995E+11 : f32
    %20 = vector.broadcast %cst_8 : f32 to vector<16x32xf32>
    %21 = arith.select %14, %19, %20 : vector<16x32xi1>, vector<16x32xf32>
    %c0_9 = arith.constant 0 : index
    %c0_10 = arith.constant 0 : index
    %22 = vector.load %arg5[%c0_9, %c0_10] : memref<16x1xf32, #tpu.memory_space<vmem>>, vector<16x1xf32>
    %cst_11 = arith.constant dense<0xFF800000> : vector<16xf32>
    %23 = vector.multi_reduction <maximumf>, %17, %cst_11 [1] : vector<16x32xf32> to vector<16xf32>
    %24 = vector.shape_cast %23 : vector<16xf32> to vector<16x1xf32>
    %25 = arith.maximumf %22, %24 : vector<16x1xf32>
    %c0_12 = arith.constant 0 : index
    %c0_13 = arith.constant 0 : index
    %26 = vector.load %arg6[%c0_12, %c0_13] : memref<16x1xf32, #tpu.memory_space<vmem>>, vector<16x1xf32>
    %cst_14 = arith.constant dense<0xFF800000> : vector<16xf32>
    %27 = vector.multi_reduction <maximumf>, %21, %cst_14 [1] : vector<16x32xf32> to vector<16xf32>
    %28 = vector.shape_cast %27 : vector<16xf32> to vector<16x1xf32>
    %29 = arith.maximumf %26, %28 : vector<16x1xf32>
    %c0_15 = arith.constant 0 : index
    %c0_16 = arith.constant 0 : index
    %30 = vector.load %arg7[%c0_15, %c0_16] : memref<16x1xf32, #tpu.memory_space<vmem>>, vector<16x1xf32>
    %c0_17 = arith.constant 0 : index
    %c0_18 = arith.constant 0 : index
    %31 = vector.load %arg5[%c0_17, %c0_18] : memref<16x1xf32, #tpu.memory_space<vmem>>, vector<16x1xf32>
    %32 = arith.subf %31, %25 : vector<16x1xf32>
    %33 = math.exp %32 : vector<16x1xf32>
    %34 = arith.mulf %30, %33 : vector<16x1xf32>
    %35 = vector.broadcast %25 : vector<16x1xf32> to vector<16x32xf32>
    %36 = arith.subf %17, %35 : vector<16x32xf32>
    %37 = math.exp %36 : vector<16x32xf32>
    %cst_19 = arith.constant dense<0.000000e+00> : vector<16xf32>
    %38 = vector.multi_reduction <add>, %37, %cst_19 [1] : vector<16x32xf32> to vector<16xf32>
    %39 = vector.shape_cast %38 : vector<16xf32> to vector<16x1xf32>
    %40 = arith.addf %34, %39 : vector<16x1xf32>
    %c0_20 = arith.constant 0 : index
    %c0_21 = arith.constant 0 : index
    %41 = vector.load %arg7[%c0_20, %c0_21] : memref<16x1xf32, #tpu.memory_space<vmem>>, vector<16x1xf32>
    tpu.vector_store %arg7[%c0_20, %c0_21], %40 {strides = array<i32>} : memref<16x1xf32, #tpu.memory_space<vmem>>, vector<16x1xf32>,
    %c0_22 = arith.constant 0 : index
    %c0_23 = arith.constant 0 : index
    %42 = vector.load %arg8[%c0_22, %c0_23] : memref<16x1xf32, #tpu.memory_space<vmem>>, vector<16x1xf32>
    %c0_24 = arith.constant 0 : index
    %c0_25 = arith.constant 0 : index
    %43 = vector.load %arg6[%c0_24, %c0_25] : memref<16x1xf32, #tpu.memory_space<vmem>>, vector<16x1xf32>
    %44 = arith.subf %43, %29 : vector<16x1xf32>
    %45 = math.exp %44 : vector<16x1xf32>
    %46 = arith.mulf %42, %45 : vector<16x1xf32>
    %47 = vector.broadcast %29 : vector<16x1xf32> to vector<16x32xf32>
    %48 = arith.subf %21, %47 : vector<16x32xf32>
    %49 = math.exp %48 : vector<16x32xf32>
    %cst_26 = arith.constant dense<0.000000e+00> : vector<16xf32>
    %50 = vector.multi_reduction <add>, %49, %cst_26 [1] : vector<16x32xf32> to vector<16xf32>
    %51 = vector.shape_cast %50 : vector<16xf32> to vector<16x1xf32>
    %52 = arith.addf %46, %51 : vector<16x1xf32>
    %c0_27 = arith.constant 0 : index
    %c0_28 = arith.constant 0 : index
    %53 = vector.load %arg8[%c0_27, %c0_28] : memref<16x1xf32, #tpu.memory_space<vmem>>, vector<16x1xf32>
    tpu.vector_store %arg8[%c0_27, %c0_28], %52 {strides = array<i32>} : memref<16x1xf32, #tpu.memory_space<vmem>>, vector<16x1xf32>,
    %c0_29 = arith.constant 0 : index
    %c0_30 = arith.constant 0 : index
    %54 = vector.load %arg5[%c0_29, %c0_30] : memref<16x1xf32, #tpu.memory_space<vmem>>, vector<16x1xf32>
    tpu.vector_store %arg5[%c0_29, %c0_30], %25 {strides = array<i32>} : memref<16x1xf32, #tpu.memory_space<vmem>>, vector<16x1xf32>,
    %c0_31 = arith.constant 0 : index
    %c0_32 = arith.constant 0 : index
    %55 = vector.load %arg6[%c0_31, %c0_32] : memref<16x1xf32, #tpu.memory_space<vmem>>, vector<16x1xf32>
    tpu.vector_store %arg6[%c0_31, %c0_32], %29 {strides = array<i32>} : memref<16x1xf32, #tpu.memory_space<vmem>>, vector<16x1xf32>,
    %c0_i32_33 = arith.constant 0 : i32
    %56 = arith.cmpi eq, %arg1, %c0_i32_33 : i32
    %57 = arith.extui %56 : i1 to i32
    %c0_i32_34 = arith.constant 0 : i32
    %58 = arith.cmpi ne, %57, %c0_i32_34 : i32
    scf.if %58 {
      %c0_35 = arith.constant 0 : index
      %c0_36 = arith.constant 0 : index
      %59 = vector.load %arg5[%c0_35, %c0_36] : memref<16x1xf32, #tpu.memory_space<vmem>>, vector<16x1xf32>
      %c0_37 = arith.constant 0 : index
      %c0_38 = arith.constant 0 : index
      %60 = vector.load %arg7[%c0_37, %c0_38] : memref<16x1xf32, #tpu.memory_space<vmem>>, vector<16x1xf32>
      %61 = math.log %60 : vector<16x1xf32>
      %62 = arith.addf %59, %61 : vector<16x1xf32>
      %c0_39 = arith.constant 0 : index
      %c0_40 = arith.constant 0 : index
      %63 = vector.load %arg6[%c0_39, %c0_40] : memref<16x1xf32, #tpu.memory_space<vmem>>, vector<16x1xf32>
      %c0_41 = arith.constant 0 : index
      %c0_42 = arith.constant 0 : index
      %64 = vector.load %arg8[%c0_41, %c0_42] : memref<16x1xf32, #tpu.memory_space<vmem>>, vector<16x1xf32>
      %65 = math.log %64 : vector<16x1xf32>
      %66 = arith.addf %63, %65 : vector<16x1xf32>
      %67 = arith.addf %62, %66 : vector<16x1xf32>
      %c0_43 = arith.constant 0 : index
      %c0_44 = arith.constant 0 : index
      %68 = vector.load %arg4[%c0_43, %c0_44] : memref<16x1xf32, #tpu.memory_space<vmem>>, vector<16x1xf32>
      tpu.vector_store %arg4[%c0_43, %c0_44], %67 {strides = array<i32>} : memref<16x1xf32, #tpu.memory_space<vmem>>, vector<16x1xf32>,
    } else {
    }
    return
  }
  func.func @transform_0(%arg0: i32, %arg1: i32) -> (i32, i32) {
    %c0_i32 = arith.constant 0 : i32
    return %arg0, %arg1 : i32, i32
  }
  func.func @transform_1(%arg0: i32, %arg1: i32) -> (i32, i32) {
    %c0_i32 = arith.constant 0 : i32
    return %arg0, %arg1 : i32, i32
  }
  func.func @transform_2(%arg0: i32, %arg1: i32) -> (i32, i32) {
    %c0_i32 = arith.constant 0 : i32
    %c0_i32_0 = arith.constant 0 : i32
    return %arg0, %c0_i32 : i32, i32
  }
}

</mosaic_0001>

<llo_original>
// kernel: multilabel_categorical_crossentropy.1
$region0: #{multilabel_categorical_crossentropy.1}
  #allocation0 [shape = 'u32[]', space=smem, size = 0x4, offset = 0x4, fixed_abs, tag = 'smem constant byte address 0x4 - core index']
  #allocation1 [shape = 'u32[144,128]{1,0:T(1,128)}', space=vmem, size = 0x12000, scoped, tag = 'internal scratch']
  #allocation2 [shape = 'f32[16,1]{1,0:T(8,128)}', space=vmem, size = 0x2000, scoped, tag = 'scratch operand']
  #allocation3 [shape = 'f32[16,1]{1,0:T(8,128)}', space=vmem, size = 0x2000, scoped, tag = 'scratch operand']
  #allocation4 [shape = 'f32[16,1]{1,0:T(8,128)}', space=vmem, size = 0x2000, scoped, tag = 'scratch operand']
  #allocation5 [shape = 'f32[16,1]{1,0:T(8,128)}', space=vmem, size = 0x2000, scoped, tag = 'scratch operand']
  %s0 = inlined_call_operand.hbm [shape: f32[16,32], index: 0, kind: input, shape index: {}]
  %s1 = inlined_call_operand.hbm [shape: f32[16,32], index: 1, kind: input, shape index: {}]
  %s2 = inlined_call_operand.vmem [shape: f32[16,1], index: 2, kind: output, shape index: {}]
  %s3 = sld [smem:[#allocation0]]
  $region34: #{multilabel_categorical_crossentropy.1} parent=0
    _
  %s5 = ssub.s32 1, %s3
  %s6 = scalar_select 0, %s5, %s3
  $region1: #{multilabel_categorical_crossentropy.1} parent=0
    #allocation6 [shape = 'u8[8192]{0}', space=vmem, size = 0x2000, scoped, tag = 'input window, operand 0, single buffered']
    #allocation7 [shape = 's32[1]{0}', space=sflag, size = 0x4, scoped, tag = 'scoped memory for multilabel_categorical_crossentropy.1']
    #allocation8 [shape = 'u8[8192]{0}', space=vmem, size = 0x2000, scoped, tag = 'input window, operand 1, single buffered']
    #allocation9 [shape = 's32[1]{0}', space=sflag, size = 0x4, scoped, tag = 'scoped memory for multilabel_categorical_crossentropy.1']
    %7 = vsyncpa [#allocation7], 0
    %8 = vsyncpa [#allocation9], 0
    // Predicated region
    $region2: #{multilabel_categorical_crossentropy.1} parent=1 // pred_check
      _
    $region3: #{multilabel_categorical_crossentropy.1} parent=1 // pred_check_branch
      %10 = sbr.rel (0) target = $region5
    $region4: #{multilabel_categorical_crossentropy.1} parent=1 // pred_region
      %s12 = ssub.s32 256, 256
      %13 = vsyncadd [#allocation7], %s12
      %s14 = sshll.u32 [#allocation6], 4
      %s15 = int_to_ptr.vmem [resolvable:$true] %s14
      %20 = dma.hbm_to_vmem [thread:$0]  %s0, 256, %s15, [#allocation7], 128, 128, 8
    $region5: #{multilabel_categorical_crossentropy.1} parent=1 // pred_fallthru
      _
    // Predicated region
    $region6: #{multilabel_categorical_crossentropy.1} parent=1 // pred_check
      _
    $region7: #{multilabel_categorical_crossentropy.1} parent=1 // pred_check_branch
      %22 = sbr.rel (0) target = $region9
    $region8: #{multilabel_categorical_crossentropy.1} parent=1 // pred_region
      %s24 = ssub.s32 256, 256
      %25 = vsyncadd [#allocation9], %s24
      %s26 = sshll.u32 [#allocation8], 4
      %s27 = int_to_ptr.vmem [resolvable:$true] %s26
      %32 = dma.hbm_to_vmem [thread:$0]  %s1, 256, %s27, [#allocation9], 128, 128, 8
    $region9: #{multilabel_categorical_crossentropy.1} parent=1 // pred_fallthru
      _
    // Predicated region
    $region10: #{multilabel_categorical_crossentropy.1} parent=1 // pred_check
      _
    $region11: #{multilabel_categorical_crossentropy.1} parent=1 // pred_check_branch
      %34 = sbr.rel (0) target = $region13
    $region12: #{multilabel_categorical_crossentropy.1} parent=1 // pred_region
      %35 = dma.done [#allocation7], 256
    $region13: #{multilabel_categorical_crossentropy.1} parent=1 // pred_fallthru
      _
    // Predicated region
    $region14: #{multilabel_categorical_crossentropy.1} parent=1 // pred_check
      _
    $region15: #{multilabel_categorical_crossentropy.1} parent=1 // pred_check_branch
      %37 = sbr.rel (0) target = $region17
    $region16: #{multilabel_categorical_crossentropy.1} parent=1 // pred_region
      %38 = dma.done [#allocation9], 256
    $region17: #{multilabel_categorical_crossentropy.1} parent=1 // pred_fallthru
      _
    %p39 = scmp.eq.s32.totalorder 0, 0
    // Predicated region
    $region18: #{multilabel_categorical_crossentropy.1} parent=1 // pred_check
      %p40 = pneg %p39
    $region19: #{multilabel_categorical_crossentropy.1} parent=1 // pred_check_branch
      %42 = sbr.rel (%p40) target = $region21
    $region20: #{multilabel_categorical_crossentropy.1} parent=1 // pred_region
      %vm43 = vcmask 7168
      %44 = vst.msk [vmem:[#allocation2] sm:$0xff] %vm43, 0.0
      %45 = vst.msk [vmem:[#allocation2 + $0x8] sm:$0xff] %vm43, 0.0
      %46 = vst.msk [vmem:[#allocation3] sm:$0xff] %vm43, 0.0
      %47 = vst.msk [vmem:[#allocation3 + $0x8] sm:$0xff] %vm43, 0.0
      %48 = vst.msk [vmem:[#allocation4] sm:$0xff] %vm43, 1.0
      %49 = vst.msk [vmem:[#allocation4 + $0x8] sm:$0xff] %vm43, 1.0
      %50 = vst.msk [vmem:[#allocation5] sm:$0xff] %vm43, 1.0
      %51 = vst.msk [vmem:[#allocation5 + $0x8] sm:$0xff] %vm43, 1.0
    $region21: #{multilabel_categorical_crossentropy.1} parent=1 // pred_fallthru
      _
    %v52 = vld [vmem:[#allocation6] sm:$0xff]
    %v53 = vld [vmem:[#allocation6 + $0x8] sm:$0xff]
    %v54 = vld [vmem:[#allocation8] sm:$0xff]
    %v55 = vld [vmem:[#allocation8 + $0x8] sm:$0xff]
    %vm56 = vcmp.ne.f32.partialorder %v54, 0.0
    %vm57 = vcmp.ne.f32.partialorder %v55, 0.0
    %vm58 = vmxor %vm56, 1
    %vm59 = vmxor %vm57, 1
    %v60 = vlaneseq
    %v61 = vand.u32 %v60, 127
    %s62 = smul.u32 0, 32
    %v63 = vstv %s62
    %v64 = vadd.s32 %v63, %v61
    %vm65 = vcmp.lt.s32.totalorder %v64, 32
    %vm66 = vmand %vm56, %vm65
    %vm67 = vmand %vm57, %vm65
    %vm68 = vmand %vm58, %vm65
    %vm69 = vmand %vm59, %vm65
    %v70 = vsel %vm68, %v52, -1e+12
    %v71 = vsel %vm69, %v53, -1e+12
    %v72 = vsub.f32 0.0, %v52
    %v73 = vsub.f32 0.0, %v53
    %v74 = vsel %vm66, %v72, -1e+12
    %v75 = vsel %vm67, %v73, -1e+12
    %v76 = vld [vmem:[#allocation2] sm:$0xff]
    %v77 = vld [vmem:[#allocation2 + $0x8] sm:$0xff]
    %vm78 = vcmask 261120
    %v79 = vsel %vm78, %v70, -inf
    %80 = vmax.xlane.f32.xlu0 %v79
    %v81 = vpop.xlane.xlu0 %80
    %v82 = vsel %vm78, %v71, -inf
    %83 = vmax.xlane.f32.xlu0 %v82
    %v84 = vpop.xlane.xlu0 %83
    %v85 = vmax.f32 %v76, %v81
    %v86 = vmax.f32 %v77, %v84
    %v87 = vld [vmem:[#allocation3] sm:$0xff]
    %v88 = vld [vmem:[#allocation3 + $0x8] sm:$0xff]
    %v89 = vsel %vm78, %v74, -inf
    %90 = vmax.xlane.f32.xlu0 %v89
    %v91 = vpop.xlane.xlu0 %90
    %v92 = vsel %vm78, %v75, -inf
    %93 = vmax.xlane.f32.xlu0 %v92
    %v94 = vpop.xlane.xlu0 %93
    %v95 = vmax.f32 %v87, %v91
    %v96 = vmax.f32 %v88, %v94
    %v97 = vld [vmem:[#allocation4] sm:$0xff]
    %v98 = vld [vmem:[#allocation4 + $0x8] sm:$0xff]
    %v99 = vsub.f32 %v76, %v85
    %v100 = vsub.f32 %v77, %v86
    %v101 = vmul.f32 %v99, 1.442695
    %v102 = vpow.pop %v101
    %v103 = vmul.f32 %v100, 1.442695
    %v104 = vpow.pop %v103
    %v105 = vmul.f32 %v97, %v102
    %v106 = vmul.f32 %v98, %v104
    %108 = vset.pattern.permute.xlu0 0
    %109 = vperm.xlu0 %108, %v85
    %v110 = vpop.permute.xlu0 %109
    %113 = vset.pattern.permute.xlu0 0
    %114 = vperm.xlu0 %113, %v86
    %v115 = vpop.permute.xlu0 %114
    %v117 = vsub.f32 %v70, %v110
    %v118 = vsub.f32 %v71, %v115
    %v119 = vmul.f32 %v117, 1.442695
    %v120 = vpow.pop %v119
    %v121 = vmul.f32 %v118, 1.442695
    %v122 = vpow.pop %v121
    %v123 = vsel %vm78, %v120, 0.0
    %124 = vadd.xlane.f32.xlu0 %v123
    %v125 = vpop.xlane.xlu0 %124
    %v126 = vsel %vm78, %v122, 0.0
    %127 = vadd.xlane.f32.xlu0 %v126
    %v128 = vpop.xlane.xlu0 %127
    %v129 = vadd.f32 %v105, %v125
    %v130 = vadd.f32 %v106, %v128
    %vm131 = vcmask 7168
    %132 = vst.msk [vmem:[#allocation4] sm:$0xff] %vm131, %v129
    %133 = vst.msk [vmem:[#allocation4 + $0x8] sm:$0xff] %vm131, %v130
    %v134 = vld [vmem:[#allocation5] sm:$0xff]
    %v135 = vld [vmem:[#allocation5 + $0x8] sm:$0xff]
    %v136 = vld [vmem:[#allocation3] sm:$0xff]
    %v137 = vld [vmem:[#allocation3 + $0x8] sm:$0xff]
    %v138 = vsub.f32 %v136, %v95
    %v139 = vsub.f32 %v137, %v96
    %v140 = vmul.f32 %v138, 1.442695
    %v141 = vpow.pop %v140
    %v142 = vmul.f32 %v139, 1.442695
    %v143 = vpow.pop %v142
    %v144 = vmul.f32 %v134, %v141
    %v145 = vmul.f32 %v135, %v143
    %147 = vset.pattern.permute.xlu0 0
    %148 = vperm.xlu0 %147, %v95
    %v149 = vpop.permute.xlu0 %148
    %152 = vset.pattern.permute.xlu0 0
    %153 = vperm.xlu0 %152, %v96
    %v154 = vpop.permute.xlu0 %153
    %v156 = vsub.f32 %v74, %v149
    %v157 = vsub.f32 %v75, %v154
    %v158 = vmul.f32 %v156, 1.442695
    %v159 = vpow.pop %v158
    %v160 = vmul.f32 %v157, 1.442695
    %v161 = vpow.pop %v160
    %v162 = vsel %vm78, %v159, 0.0
    %163 = vadd.xlane.f32.xlu0 %v162
    %v164 = vpop.xlane.xlu0 %163
    %v165 = vsel %vm78, %v161, 0.0
    %166 = vadd.xlane.f32.xlu0 %v165
    %v167 = vpop.xlane.xlu0 %166
    %v168 = vadd.f32 %v144, %v164
    %v169 = vadd.f32 %v145, %v167
    %170 = vst.msk [vmem:[#allocation5] sm:$0xff] %vm131, %v168
    %171 = vst.msk [vmem:[#allocation5 + $0x8] sm:$0xff] %vm131, %v169
    %172 = vst.msk [vmem:[#allocation2] sm:$0xff] %vm131, %v85
    %173 = vst.msk [vmem:[#allocation2 + $0x8] sm:$0xff] %vm131, %v86
    %174 = vst.msk [vmem:[#allocation3] sm:$0xff] %vm131, %v95
    %175 = vst.msk [vmem:[#allocation3 + $0x8] sm:$0xff] %vm131, %v96
    // Predicated region
    $region22: #{multilabel_categorical_crossentropy.1} parent=1 // pred_check
      %p176 = pneg %p39
    $region23: #{multilabel_categorical_crossentropy.1} parent=1 // pred_check_branch
      %178 = sbr.rel (%p176) target = $region25
    $region24: #{multilabel_categorical_crossentropy.1} parent=1 // pred_region
      %v179 = vld [vmem:[#allocation2] sm:$0xff]
      %v180 = vld [vmem:[#allocation2 + $0x8] sm:$0xff]
      %v181 = vld [vmem:[#allocation4] sm:$0xff]
      %v182 = vld [vmem:[#allocation4 + $0x8] sm:$0xff]
      %v183 = vlog2.pop %v181
      %v184 = vmul.f32 %v183, 0.6931472
      %v185 = vlog2.pop %v182
      %v186 = vmul.f32 %v185, 0.6931472
      %v187 = vadd.f32 %v179, %v184
      %v188 = vadd.f32 %v180, %v186
      %v189 = vld [vmem:[#allocation3] sm:$0xff]
      %v190 = vld [vmem:[#allocation3 + $0x8] sm:$0xff]
      %v191 = vld [vmem:[#allocation5] sm:$0xff]
      %v192 = vld [vmem:[#allocation5 + $0x8] sm:$0xff]
      %v193 = vlog2.pop %v191
      %v194 = vmul.f32 %v193, 0.6931472
      %v195 = vlog2.pop %v192
      %v196 = vmul.f32 %v195, 0.6931472
      %v197 = vadd.f32 %v189, %v194
      %v198 = vadd.f32 %v190, %v196
      %v199 = vadd.f32 %v187, %v197
      %v200 = vadd.f32 %v188, %v198
      %201 = vst.msk [vmem:[%s2] sm:$0xff] %vm131, %v199
      %202 = vst.msk [vmem:[%s2 + $0x8] sm:$0xff] %vm131, %v200
    $region25: #{multilabel_categorical_crossentropy.1} parent=1 // pred_fallthru
      _
    // Predicated region
    $region26: #{multilabel_categorical_crossentropy.1} parent=1 // pred_check
      _
    $region27: #{multilabel_categorical_crossentropy.1} parent=1 // pred_check_branch
      %204 = sbr.rel (0) target = $region29
    $region28: #{multilabel_categorical_crossentropy.1} parent=1 // pred_region
      _
    $region29: #{multilabel_categorical_crossentropy.1} parent=1 // pred_fallthru
      _
    // Predicated region
    $region30: #{multilabel_categorical_crossentropy.1} parent=1 // pred_check
      _
    $region31: #{multilabel_categorical_crossentropy.1} parent=1 // pred_check_branch
      %206 = sbr.rel (0) target = $region33
    $region32: #{multilabel_categorical_crossentropy.1} parent=1 // pred_region
      _
    $region33: #{multilabel_categorical_crossentropy.1} parent=1 // pred_fallthru
      _
    %207 = vsyncpa [#allocation7], 1
    %208 = vsyncpa [#allocation9], 1

</llo_original>
